<compile_context>
chip_gen: v5e
topology: v5e:2x2
jax: 0.10.0
libtpu: 0.0.40
codegen_flags: <defaults>
</compile_context>

<pallas_src>
import jax
import jax.numpy as jnp
from jax.experimental import pallas as pl
from jax.experimental.pallas import tpu as pltpu

FRAME_SHIFT_SAMPLES = 16000 * 0.02       # 320.0 samples per frame
_DEFAULT_BLOCK_BYTES = 2 * 1024 * 1024   # ~2 MiB of mask bytes per grid step


def _make_sum_kernel(T, T_TILE, n_t_total, n_t_inner):
    """Kernel body; grid = (batch_blocks, split, time_blocks_per_split)."""
    needs_tail = (T % T_TILE) != 0

    def kernel(mask_ref, out_ref):
        s = pl.program_id(1)
        t = pl.program_id(2)

        @pl.when(t == 0)
        def _():
            out_ref[...] = jnp.zeros_like(out_ref)

        # Count nonzeros; the bool->int32 widen is fused into the reduction.
        valid = mask_ref[...] != 0

        if not needs_tail:
            out_ref[...] += jnp.sum(valid, axis=1, dtype=jnp.int32, keepdims=True)
        else:
            gt = s * n_t_inner + t              # global time-block index
            is_last = gt == (n_t_total - 1)

            @pl.when(jnp.logical_not(is_last))
            def _():
                out_ref[...] += jnp.sum(valid, axis=1, dtype=jnp.int32,
                                        keepdims=True)

            @pl.when(is_last)
            def _():
                # Pallas pads out-of-bounds lanes of a partial block with
                # unspecified data -> mask them, but only on this last block.
                col = jax.lax.broadcasted_iota(jnp.int32, valid.shape, 1)
                tail = T - (n_t_total - 1) * T_TILE
                masked = jnp.logical_and(valid, col < tail)
                out_ref[...] += jnp.sum(masked, axis=1, dtype=jnp.int32,
                                        keepdims=True)

    return kernel


def compute_length_from_mask(mask, *, block_bytes=_DEFAULT_BLOCK_BYTES):
    """mask: (B, T) array (0/1 valued, any dtype). Returns python list of ints.

    Note: passing the mask as bool/int8 is 4x cheaper in HBM reads than float32
    (this kernel is purely input-byte bound); convert at the producer.
    """
    mask = jnp.asarray(mask)
    if mask.dtype == jnp.bool_:
        mask = mask.astype(jnp.int8)             # 1-byte lanes, no f32 inflation
    B, T = mask.shape
    itemsize = jnp.dtype(mask.dtype).itemsize

    # --- batch tiling: full B when small; otherwise sublane-packing aligned.
    pack = max(8, 32 // itemsize)                # int8 -> 32, bf16 -> 16, f32 -> 8
    if B <= 256 or B % pack != 0:
        B_TILE = B
    else:
        B_TILE = pack
    n_b = B // B_TILE

    # --- time tiling from a byte budget (MiB-scale, multiple-of-128 lanes).
    if B_TILE * T * itemsize <= block_bytes:
        T_TILE = T                               # whole time axis in one block
    else:
        T_TILE = max(128, (block_bytes // (B_TILE * itemsize)) // 128 * 128)
    n_t = pl.cdiv(T, T_TILE)

    # --- split the reduction over two parallel grid entries when the batch
    #     axis is degenerate (lets v7x's two TensorCores both stream the mask).
    n_split = 2 if (n_b == 1 and n_t >= 4 and n_t % 2 == 0) else 1
    n_t_inner = n_t // n_split

    block_b = B_TILE * T_TILE * itemsize

    partial = pl.pallas_call(
        _make_sum_kernel(T, T_TILE, n_t, n_t_inner),
        out_shape=jax.ShapeDtypeStruct((n_split, B, 1), jnp.int32),
        grid_spec=pltpu.PrefetchScalarGridSpec(
            num_scalar_prefetch=0,
            grid=(n_b, n_split, n_t_inner),
            in_specs=[pl.BlockSpec((B_TILE, T_TILE),
                                   lambda b, s, t: (b, s * n_t_inner + t))],
            out_specs=pl.BlockSpec((pl.Squeezed(), B_TILE, 1),
                                   lambda b, s, t: (s, b, 0)),
        ),
        compiler_params=pltpu.CompilerParams(
            dimension_semantics=("parallel", "parallel", "arbitrary"),
            vmem_limit_bytes=max(32 * 1024 * 1024, 4 * block_b),
        ),
        cost_estimate=pl.CostEstimate(
            flops=B * T,
            transcendentals=0,
            bytes_accessed=B * T * itemsize + B * n_split * 4),
    )(mask)

    # Tiny finalize (B * n_split elements): merge per-split partial sums and
    # apply the f32 floor-divide exactly as torch.div(..., rounding_mode='floor').
    wav = jnp.sum(partial, axis=0).reshape(B).astype(jnp.float32)
    feat = (jnp.floor((wav - 1.0) / FRAME_SHIFT_SAMPLES) + 1.0).astype(jnp.int32)
    feat = jax.block_until_ready(feat)
    return jax.device_get(feat).tolist()


class Pooling:
    """JAX/Pallas mirror of the PyTorch Pooling module."""

    def compute_length_from_mask(self, mask):
        return compute_length_from_mask(mask)

    def __call__(self, x, mask):
        # Matches the reference: forward is not implemented.
        raise NotImplementedError


def _reference(mask):
    wav_lens = jnp.sum(jnp.asarray(mask).astype(jnp.float32), axis=1)
    feat = (jnp.floor((wav_lens - 1.0) / FRAME_SHIFT_SAMPLES) + 1.0).astype(jnp.int32)
    return jax.device_get(feat).tolist()


if __name__ == "__main__":
    key = jax.random.PRNGKey(0)
    pool = Pooling()

    # --- Test 1: small float32 mask (typical torch-module input), single block.
    B, T = 2, 1600  # 0.1 s @ 16 kHz
    k1, k2 = jax.random.split(key)
    lens = jax.random.randint(k1, (B,), minval=1, maxval=T + 1)          # (B,)
    time_idx = jnp.arange(T)[None, :]                                    # (1, T)
    mask = (time_idx < lens[:, None]).astype(jnp.float32)                # (B, T)

    got = pool.compute_length_from_mask(mask)
    assert got == _reference(mask), (got, _reference(mask))

    # --- Test 2: bool mask (shrunk to int8 in the wrapper), all-zero row,
    #             default (single-block) tiling.
    B2, T2 = 16, 9000
    lens2 = jax.random.randint(k2, (B2,), minval=0, maxval=T2 + 1)
    lens2 = lens2.at[0].set(0)                                           # empty row
    time_idx2 = jnp.arange(T2)[None, :]
    mask2 = time_idx2 < lens2[:, None]                                   # bool

    got2 = pool.compute_length_from_mask(mask2)
    assert got2 == _reference(mask2), (got2, _reference(mask2))

    # --- Test 3: same data, tiny block budget to force the tiled path
    #             (multi time blocks + 2-way parallel T split + tail masking).
    got3 = compute_length_from_mask(mask2, block_bytes=4096)
    assert got3 == _reference(mask2), (got3, _reference(mask2))

    print("KERNEL_OK")
</pallas_src>

<mosaic_0001>
module attributes {stable_mosaic.version = 11 : i64} {
  func.func @kernel(%arg0: i32, %arg1: i32, %arg2: i32, %arg3: memref<2x1600xf32, #tpu.memory_space<vmem>>, %arg4: memref<1x2x1xi32, #tpu.memory_space<vmem>>) attributes {dimension_semantics = [#tpu.dimension_semantics<parallel>, #tpu.dimension_semantics<parallel>, #tpu.dimension_semantics<arbitrary>], iteration_bounds = array<i64: 1, 1, 1>, scalar_prefetch = 0 : i64, scratch_operands = 0 : i64, tpu.core_type = #tpu.core_type<tc>, window_params = [{transform_indices = @transform_0, window_bounds = array<i64: 2, 1600>}, {transform_indices = @transform_1, window_bounds = array<i64: 1, 2, 1>}]} {
    %c0_i32 = arith.constant 0 : i32
    %0 = arith.cmpi eq, %arg2, %c0_i32 : i32
    %1 = arith.extui %0 : i1 to i32
    %c0_i32_0 = arith.constant 0 : i32
    %2 = arith.cmpi ne, %1, %c0_i32_0 : i32
    scf.if %2 {
      %c0_i32_9 = arith.constant 0 : i32
      %15 = vector.broadcast %c0_i32_9 : i32 to vector<2x1xi32>
      %c0_10 = arith.constant 0 : index
      %c0_11 = arith.constant 0 : index
      %c0_12 = arith.constant 0 : index
      %16 = vector.load %arg4[%c0_10, %c0_11, %c0_12] : memref<1x2x1xi32, #tpu.memory_space<vmem>>, vector<1x2x1xi32>
      %17 = vector.shape_cast %16 : vector<1x2x1xi32> to vector<2x1xi32>
      %18 = vector.shape_cast %15 : vector<2x1xi32> to vector<1x2x1xi32>
      tpu.vector_store %arg4[%c0_10, %c0_11, %c0_12], %18 {strides = array<i32>} : memref<1x2x1xi32, #tpu.memory_space<vmem>>, vector<1x2x1xi32>,
    } else {
    }
    %c0 = arith.constant 0 : index
    %c0_1 = arith.constant 0 : index
    %3 = vector.load %arg3[%c0, %c0_1] : memref<2x1600xf32, #tpu.memory_space<vmem>>, vector<2x1600xf32>
    %cst = arith.constant 0.000000e+00 : f32
    %4 = vector.broadcast %cst : f32 to vector<2x1600xf32>
    %5 = arith.cmpf one, %3, %4 : vector<2x1600xf32>
    %c0_2 = arith.constant 0 : index
    %c0_3 = arith.constant 0 : index
    %c0_4 = arith.constant 0 : index
    %6 = vector.load %arg4[%c0_2, %c0_3, %c0_4] : memref<1x2x1xi32, #tpu.memory_space<vmem>>, vector<1x2x1xi32>
    %7 = vector.shape_cast %6 : vector<1x2x1xi32> to vector<2x1xi32>
    %8 = arith.extui %5 : vector<2x1600xi1> to vector<2x1600xi32>
    %cst_5 = arith.constant dense<0> : vector<2xi32>
    %9 = vector.multi_reduction <add>, %8, %cst_5 [1] : vector<2x1600xi32> to vector<2xi32>
    %10 = vector.shape_cast %9 : vector<2xi32> to vector<2x1xi32>
    %11 = arith.addi %7, %10 : vector<2x1xi32>
    %c0_6 = arith.constant 0 : index
    %c0_7 = arith.constant 0 : index
    %c0_8 = arith.constant 0 : index
    %12 = vector.load %arg4[%c0_6, %c0_7, %c0_8] : memref<1x2x1xi32, #tpu.memory_space<vmem>>, vector<1x2x1xi32>
    %13 = vector.shape_cast %12 : vector<1x2x1xi32> to vector<2x1xi32>
    %14 = vector.shape_cast %11 : vector<2x1xi32> to vector<1x2x1xi32>
    tpu.vector_store %arg4[%c0_6, %c0_7, %c0_8], %14 {strides = array<i32>} : memref<1x2x1xi32, #tpu.memory_space<vmem>>, vector<1x2x1xi32>,
    return
  }
  func.func @transform_0(%arg0: i32, %arg1: i32, %arg2: i32) -> (i32, i32) {
    %c1_i32 = arith.constant 1 : i32
    %0 = arith.muli %arg1, %c1_i32 : i32
    %1 = arith.addi %0, %arg2 : i32
    %c0_i32 = arith.constant 0 : i32
    return %arg0, %1 : i32, i32
  }
  func.func @transform_1(%arg0: i32, %arg1: i32, %arg2: i32) -> (i32, i32, i32) {
    %c0_i32 = arith.constant 0 : i32
    %c0_i32_0 = arith.constant 0 : i32
    return %arg1, %arg0, %c0_i32 : i32, i32, i32
  }
}

</mosaic_0001>

<llo_original>
// kernel: tpu_custom_call.1
$region0: #{tpu_custom_call.1}
  #allocation0 [shape = 'u32[]', space=smem, size = 0x4, offset = 0x4, fixed_abs, tag = 'smem constant byte address 0x4 - core index']
  #allocation1 [shape = 'u32[72,128]{1,0:T(1,128)}', space=vmem, size = 0x9000, scoped, tag = 'internal scratch']
  %s0 = inlined_call_operand.hbm [shape: f32[2,1600], index: 0, kind: input, shape index: {}]
  %s1 = inlined_call_operand.vmem [shape: s32[1,2,1], index: 1, kind: output, shape index: {}]
  %s2 = sld [smem:[#allocation0]]
  $region22: #{tpu_custom_call.1} parent=0
    _
  %s4 = ssub.s32 1, %s2
  %s5 = scalar_select 0, %s4, %s2
  $region1: #{tpu_custom_call.1} parent=0
    #allocation2 [shape = 'u8[13312]{0}', space=vmem, size = 0x3400, scoped, tag = 'input window, operand 0, single buffered']
    #allocation3 [shape = 's32[1]{0}', space=sflag, size = 0x4, scoped, tag = 'scoped memory for tpu_custom_call.1']
    %6 = vsyncpa [#allocation3], 0
    // Predicated region
    $region2: #{tpu_custom_call.1} parent=1 // pred_check
      _
    $region3: #{tpu_custom_call.1} parent=1 // pred_check_branch
      %8 = sbr.rel (0) target = $region5
    $region4: #{tpu_custom_call.1} parent=1 // pred_region
      %s9 = sadd.s32 0, 0
      %s10 = smul.u32 13, %s9
      %12 = vsyncadd [#allocation3], 0
      %s13 = smul.addr %s10, 2
      %s14 = scalar_lea.hbm %s0, %s13
      %s16 = sshll.u32 %s14, 4
      %s17 = int_to_ptr.hbm [resolvable:$true] %s16
      %s18 = sshll.u32 [#allocation2], 4
      %s19 = int_to_ptr.vmem [resolvable:$true] %s18
      %21 = dma.hbm_to_vmem [thread:$0]  %s17, 416, %s19, [#allocation3]
    $region5: #{tpu_custom_call.1} parent=1 // pred_fallthru
      _
    // Predicated region
    $region6: #{tpu_custom_call.1} parent=1 // pred_check
      _
    $region7: #{tpu_custom_call.1} parent=1 // pred_check_branch
      %23 = sbr.rel (0) target = $region9
    $region8: #{tpu_custom_call.1} parent=1 // pred_region
      %25 = dma.done [#allocation3], 416
    $region9: #{tpu_custom_call.1} parent=1 // pred_fallthru
      _
    %s26 = sadd.s32 0, 0
    %s27 = smul.u32 13, %s26
    %p28 = scmp.eq.s32.totalorder 0, 0
    // Predicated region
    $region10: #{tpu_custom_call.1} parent=1 // pred_check
      %p29 = pneg %p28
    $region11: #{tpu_custom_call.1} parent=1 // pred_check_branch
      %31 = sbr.rel (%p29) target = $region13
    $region12: #{tpu_custom_call.1} parent=1 // pred_region
      %vm32 = vcmask 1024
      %33 = vst.msk [vmem:[%s1] sm:$0x3] %vm32, 0
    $region13: #{tpu_custom_call.1} parent=1 // pred_fallthru
      _
    %v34 = vld [vmem:[#allocation2] sm:$0xff]
    %v35 = vld [vmem:[#allocation2 + $0x8] sm:$0xff]
    %v36 = vld [vmem:[#allocation2 + $0x10] sm:$0xff]
    %v37 = vld [vmem:[#allocation2 + $0x18] sm:$0x3]
    %vm38 = vcmp.ne.f32.partialorder %v34, 0.0
    %vm39 = vcmp.ne.f32.partialorder %v35, 0.0
    %vm40 = vcmp.ne.f32.partialorder %v36, 0.0
    %vm41 = vcmp.ne.f32.partialorder %v37, 0.0
    %v42 = vld [vmem:[%s1] sm:$0x3]
    %v43 = vsel %vm38, 1, 0
    %v44 = vsel %vm39, 1, 0
    %v45 = vsel %vm40, 1, 0
    %v46 = vsel %vm41, 1, 0
    %47 = vst [vmem:[#allocation1] ss:$4 sm:$0xff] %v43
    %s48 = scalar_lea.vmem [#allocation1], 32
    %49 = vst [vmem:[%s48] ss:$4 sm:$0xff] %v44
    %v50 = vld.sshfl [vmem:[#allocation1] sm:$0xff pattern:$0x73625140]
    %v51 = vld.sshfl [vmem:[#allocation1 + $0x8] sm:$0xff pattern:$0x73625140]
    %v52 = vld.sshfl [vmem:[#allocation1 + $0x10] sm:$0xff pattern:$0x73625140]
    %v53 = vld.sshfl [vmem:[#allocation1 + $0x18] sm:$0xff pattern:$0x73625140]
    %v54 = vld.sshfl [vmem:[#allocation1 + $0x20] sm:$0xff pattern:$0x73625140]
    %v55 = vld.sshfl [vmem:[#allocation1 + $0x28] sm:$0xff pattern:$0x73625140]
    %v56 = vld.sshfl [vmem:[#allocation1 + $0x30] sm:$0xff pattern:$0x73625140]
    %v57 = vld.sshfl [vmem:[#allocation1 + $0x38] sm:$0xff pattern:$0x73625140]
    %58 = vst [vmem:[#allocation1] ss:$4 sm:$0xff] %v45
    %59 = vst [vmem:[%s48] ss:$4 sm:$0xff] %v46
    %v60 = vld.sshfl [vmem:[#allocation1] sm:$0xff pattern:$0x73625140]
    %v61 = vld.sshfl [vmem:[#allocation1 + $0x8] sm:$0xff pattern:$0x73625140]
    %v62 = vld.sshfl [vmem:[#allocation1 + $0x10] sm:$0xff pattern:$0x73625140]
    %v63 = vld.sshfl [vmem:[#allocation1 + $0x18] sm:$0xff pattern:$0x73625140]
    %v64 = vld.sshfl [vmem:[#allocation1 + $0x20] sm:$0xff pattern:$0x73625140]
    %vm65 = vcmask 1041408
    %v66 = vsel %vm65, %v50, 0
    %v67 = vsel %vm65, %v51, 0
    %v68 = vsel %vm65, %v52, 0
    %v69 = vsel %vm65, %v53, 0
    %v70 = vsel %vm65, %v54, 0
    %v71 = vadd.s32 %v66, %v70
    %v72 = vsel %vm65, %v55, 0
    %v73 = vadd.s32 %v67, %v72
    %v74 = vsel %vm65, %v56, 0
    %v75 = vadd.s32 %v68, %v74
    %v76 = vsel %vm65, %v57, 0
    %v77 = vadd.s32 %v69, %v76
    %v78 = vsel %vm65, %v60, 0
    %v79 = vadd.s32 %v71, %v78
    %v80 = vsel %vm65, %v61, 0
    %v81 = vadd.s32 %v73, %v80
    %v82 = vsel %vm65, %v62, 0
    %v83 = vadd.s32 %v75, %v82
    %v84 = vsel %vm65, %v63, 0
    %v85 = vadd.s32 %v77, %v84
    %vm86 = vcmask 517120
    %v87 = vsel %vm86, %v64, 0
    %v88 = vadd.s32 %v79, %v87
    %v89 = vadd.s32 %v88, %v81
    %v90 = vadd.s32 %v83, %v85
    %v91 = vadd.s32 %v89, %v90
    %v92 = vand.u32 %v91, 65535
    %v93 = vshrl.u32 %v91, 16
    %v94 = vcvt.s32.f32 %v92
    %v95 = vcvt.s32.f32 %v93
    %96 = vadd.xlane.f32.xlu0 %v94
    %v97 = vpop.xlane.xlu0 %96
    %98 = vadd.xlane.f32.xlu0 %v95
    %v99 = vpop.xlane.xlu0 %98
    %v100 = vcvt.f32.s32 %v97
    %v101 = vcvt.f32.s32 %v99
    %v102 = vshll.u32 %v101, 16
    %v103 = vadd.s32 %v102, %v100
    %v104 = vadd.s32 %v42, %v103
    %vm105 = vcmask 1024
    %106 = vst.msk [vmem:[%s1] sm:$0x3] %vm105, %v104
    // Predicated region
    $region14: #{tpu_custom_call.1} parent=1 // pred_check
      _
    $region15: #{tpu_custom_call.1} parent=1 // pred_check_branch
      %108 = sbr.rel (0) target = $region17
    $region16: #{tpu_custom_call.1} parent=1 // pred_region
      _
    $region17: #{tpu_custom_call.1} parent=1 // pred_fallthru
      _
    // Predicated region
    $region18: #{tpu_custom_call.1} parent=1 // pred_check
      _
    $region19: #{tpu_custom_call.1} parent=1 // pred_check_branch
      %110 = sbr.rel (0) target = $region21
    $region20: #{tpu_custom_call.1} parent=1 // pred_region
      _
    $region21: #{tpu_custom_call.1} parent=1 // pred_fallthru
      _
    %111 = vsyncpa [#allocation3], 1

</llo_original>
